<compile_context>
chip_gen: v5e
topology: v5e:2x2
jax: 0.10.0
libtpu: 0.0.40
codegen_flags: <defaults>
</compile_context>

<pallas_src>
import functools

import jax
import jax.numpy as jnp
from jax.experimental import pallas as pl
from jax.experimental.pallas import tpu as pltpu


# ----------------------------- kernel helpers ------------------------------

def _shift_flat(x, d):
    """y[:, p] = x[:, p + d], zero-filled outside [0, HW).  x: (C, HW)."""
    if d == 0:
        return x
    c, hw = x.shape
    z = jnp.zeros((c, abs(d)), x.dtype)
    if d > 0:
        return jnp.concatenate([x[:, d:], z], axis=1)
    return jnp.concatenate([z, x[:, :hw + d]], axis=1)


def _relu_dw_pw(x, wdw, wpw, bias, *, W, pre_relu):
    """[optional ReLU] -> depthwise 3x3 (pad=1, BN folded into wdw)
       -> pointwise 1x1 (BN folded into wpw / bias).  All VPU work.

    x    : (Ci, HW) f32, spatial flattened row-major (p = h*W + w) on lanes
    wdw  : (Ci, 9)  folded depthwise taps, tap index = (kh+1)*3 + (kw+1)
    wpw  : (Co, Ci) folded pointwise weights
    bias : (Co, 1)  folded bias
    returns (Co, HW) f32
    """
    ci_dim, hw = x.shape
    co_dim = wpw.shape[0]
    if pre_relu:
        x = jnp.maximum(x, 0.0)

    # Column index within each image row, to mask taps that would otherwise
    # wrap across row boundaries in the flattened spatial layout.
    p = jax.lax.broadcasted_iota(jnp.int32, (1, hw), 1)
    if (W & (W - 1)) == 0:
        col = jnp.bitwise_and(p, W - 1)
    else:
        col = p % W
    not_first_col = col > 0           # valid positions for a kw = -1 tap
    not_last_col = col < (W - 1)      # valid positions for a kw = +1 tap

    # Depthwise 3x3: 9 shifted FMAs on the full (Ci, HW) tile (single hoisted
    # load; shifts stay on the lane axis, no unaligned sublane slicing).
    acc = jnp.zeros((ci_dim, hw), jnp.float32)
    for kh in (-1, 0, 1):
        for kw in (-1, 0, 1):
            tap = (kh + 1) * 3 + (kw + 1)
            shifted = _shift_flat(x, kh * W + kw)
            if kw == -1:
                shifted = jnp.where(not_first_col, shifted, 0.0)
            elif kw == 1:
                shifted = jnp.where(not_last_col, shifted, 0.0)
            acc = acc + shifted * wdw[:, tap:tap + 1]

    # Pointwise 1x1 as Ci VPU FMAs per output channel (K is far below the
    # MXU tile at these channel counts, so skip the MXU round-trip).
    out = jnp.zeros((co_dim, hw), jnp.float32) + bias
    for ci in range(ci_dim):
        out = out + acc[ci:ci + 1, :] * wpw[:, ci:ci + 1]
    return out


def _stage_kernel(x_ref, wdw_ref, wpw_ref, bias_ref, o_ref, *, W, pre_relu):
    """One grid step = one batch element of: [ReLU] -> SepConv2d -> BN."""
    x = x_ref[0].astype(jnp.float32)
    out = _relu_dw_pw(x, wdw_ref[...], wpw_ref[...], bias_ref[...],
                      W=W, pre_relu=pre_relu)
    o_ref[0] = out.astype(o_ref.dtype)


def _final_kernel(x_ref, inp_ref, wdw_ref, wpw_ref, wskip_ref, bias_ref,
                  o_ref, *, W, pre_relu):
    """Last stage fused with the skip path:
       [ReLU] -> SepConv2d -> BN  +  (1x1 skip conv -> BN)(block input)."""
    x = x_ref[0].astype(jnp.float32)
    out = _relu_dw_pw(x, wdw_ref[...], wpw_ref[...], bias_ref[...],
                      W=W, pre_relu=pre_relu)
    inp = inp_ref[0].astype(jnp.float32)
    wsk = wskip_ref[...]
    for ci in range(inp.shape[0]):
        out = out + inp[ci:ci + 1, :] * wsk[:, ci:ci + 1]
    o_ref[0] = out.astype(o_ref.dtype)


# ------------------------------ pallas wrappers -----------------------------

_COMPILER_PARAMS = pltpu.CompilerParams(
    dimension_semantics=("parallel",),          # batch axis -> both TCs on v7x
    vmem_limit_bytes=32 * 1024 * 1024)


def _run_stage(x_flat, wdw_f, wpw_f, bias_f, *, W, pre_relu):
    N, Ci, HW = x_flat.shape
    Co = wpw_f.shape[0]
    kern = functools.partial(_stage_kernel, W=W, pre_relu=pre_relu)
    return pl.pallas_call(
        kern,
        out_shape=jax.ShapeDtypeStruct((N, Co, HW), jnp.float32),
        grid_spec=pltpu.PrefetchScalarGridSpec(
            num_scalar_prefetch=0,
            grid=(N,),
            in_specs=[
                pl.BlockSpec((1, Ci, HW), lambda n: (n, 0, 0)),
                pl.BlockSpec((Ci, 9), lambda n: (0, 0)),
                pl.BlockSpec((Co, Ci), lambda n: (0, 0)),
                pl.BlockSpec((Co, 1), lambda n: (0, 0)),
            ],
            out_specs=pl.BlockSpec((1, Co, HW), lambda n: (n, 0, 0)),
        ),
        compiler_params=_COMPILER_PARAMS,
    )(x_flat, wdw_f, wpw_f, bias_f)


def _run_final_stage(x_flat, inp_flat, wdw_f, wpw_f, wskip_f, bias_f, *,
                     W, pre_relu):
    N, Ci, HW = x_flat.shape
    C0 = inp_flat.shape[1]
    Co = wpw_f.shape[0]
    kern = functools.partial(_final_kernel, W=W, pre_relu=pre_relu)
    return pl.pallas_call(
        kern,
        out_shape=jax.ShapeDtypeStruct((N, Co, HW), jnp.float32),
        grid_spec=pltpu.PrefetchScalarGridSpec(
            num_scalar_prefetch=0,
            grid=(N,),
            in_specs=[
                pl.BlockSpec((1, Ci, HW), lambda n: (n, 0, 0)),
                pl.BlockSpec((1, C0, HW), lambda n: (n, 0, 0)),
                pl.BlockSpec((Ci, 9), lambda n: (0, 0)),
                pl.BlockSpec((Co, Ci), lambda n: (0, 0)),
                pl.BlockSpec((Co, C0), lambda n: (0, 0)),
                pl.BlockSpec((Co, 1), lambda n: (0, 0)),
            ],
            out_specs=pl.BlockSpec((1, Co, HW), lambda n: (n, 0, 0)),
        ),
        compiler_params=_COMPILER_PARAMS,
    )(x_flat, inp_flat, wdw_f, wpw_f, wskip_f, bias_f)


# ------------------------- BN folding (wrapper glue) ------------------------

def _bn_fold(gamma, beta, mean, var, eps=1e-5):
    scale = gamma / jnp.sqrt(var + eps)
    shift = beta - mean * scale
    return scale, shift


def _fold_stage(stage, eps=1e-5):
    """Fold (dw3x3 -> BN_a -> pw1x1 -> BN_b) into (wdw_f, wpw_f, bias_f)."""
    w_dw, bn_a, w_pw, bn_b = (stage["w_dw"], stage["bn_a"],
                              stage["w_pw"], stage["bn_b"])
    ci = w_dw.shape[0]
    s_a, t_a = _bn_fold(*bn_a, eps=eps)
    s_b, t_b = _bn_fold(*bn_b, eps=eps)
    wdw_f = (w_dw[:, 0, :, :] * s_a[:, None, None]).reshape(ci, 9)  # (Ci, 9)
    wpw2 = w_pw[:, :, 0, 0]                                         # (Co, Ci)
    wpw_f = wpw2 * s_b[:, None]
    bias_f = (s_b * (wpw2 @ t_a) + t_b)[:, None]                    # (Co, 1)
    return wdw_f, wpw_f, bias_f


def _fold_skip(skip, eps=1e-5):
    s_s, t_s = _bn_fold(*skip["bn"], eps=eps)
    w2 = skip["w"][:, :, 0, 0]                                      # (Co, C0)
    return w2 * s_s[:, None], t_s[:, None]


# ------------------------------- Block forward ------------------------------

def block_forward(x_nchw, params, *, start_with_relu=True, eps=1e-5):
    """Forward pass of Block (stride=1, dilation=1), inference-mode BN."""
    N, C0, H, W = x_nchw.shape
    HW = H * W
    x_flat = x_nchw.reshape(N, C0, HW)          # metadata-only reshape

    s1, s2, s3 = params["stages"]
    wdw1, wpw1, b1 = _fold_stage(s1, eps)
    h = _run_stage(x_flat, wdw1, wpw1, b1, W=W, pre_relu=start_with_relu)
    wdw2, wpw2, b2 = _fold_stage(s2, eps)
    h = _run_stage(h, wdw2, wpw2, b2, W=W, pre_relu=True)
    wdw3, wpw3, b3 = _fold_stage(s3, eps)

    if params["skip"] is not None:
        wsk, bsk = _fold_skip(params["skip"], eps)
        out_flat = _run_final_stage(h, x_flat, wdw3, wpw3, wsk, b3 + bsk,
                                    W=W, pre_relu=True)
    else:
        # identity skip (planes == inplanes, stride == 1)
        out_flat = _run_stage(h, wdw3, wpw3, b3, W=W, pre_relu=True) + x_flat

    return out_flat.reshape(N, out_flat.shape[1], H, W)


# ----------------------------- pure-JAX reference ---------------------------

def _ref_sepconv_bn(x, stage, eps=1e-5):
    ci = x.shape[1]
    y = jax.lax.conv_general_dilated(
        x, stage["w_dw"], window_strides=(1, 1), padding=((1, 1), (1, 1)),
        dimension_numbers=("NCHW", "OIHW", "NCHW"),
        feature_group_count=ci, precision="highest")
    s, t = _bn_fold(*stage["bn_a"], eps=eps)
    y = y * s[None, :, None, None] + t[None, :, None, None]
    y = jax.lax.conv_general_dilated(
        y, stage["w_pw"], window_strides=(1, 1), padding=((0, 0), (0, 0)),
        dimension_numbers=("NCHW", "OIHW", "NCHW"), precision="highest")
    s, t = _bn_fold(*stage["bn_b"], eps=eps)
    return y * s[None, :, None, None] + t[None, :, None, None]


def _ref_block(x, params, *, start_with_relu=True, eps=1e-5):
    s1, s2, s3 = params["stages"]
    h = jnp.maximum(x, 0.0) if start_with_relu else x
    h = _ref_sepconv_bn(h, s1, eps)
    h = jnp.maximum(h, 0.0)
    h = _ref_sepconv_bn(h, s2, eps)
    h = jnp.maximum(h, 0.0)
    h = _ref_sepconv_bn(h, s3, eps)
    if params["skip"] is not None:
        sk = params["skip"]
        skip = jax.lax.conv_general_dilated(
            x, sk["w"], window_strides=(1, 1), padding=((0, 0), (0, 0)),
            dimension_numbers=("NCHW", "OIHW", "NCHW"), precision="highest")
        s, t = _bn_fold(*sk["bn"], eps=eps)
        skip = skip * s[None, :, None, None] + t[None, :, None, None]
    else:
        skip = x
    return h + skip


# ----------------------------------- demo -----------------------------------

def _init_bn(key, c):
    k1, k2, k3, k4 = jax.random.split(key, 4)
    gamma = 1.0 + 0.1 * jax.random.normal(k1, (c,), jnp.float32)
    beta = 0.1 * jax.random.normal(k2, (c,), jnp.float32)
    mean = 0.1 * jax.random.normal(k3, (c,), jnp.float32)
    var = jnp.abs(1.0 + 0.1 * jax.random.normal(k4, (c,), jnp.float32))
    return (gamma, beta, mean, var)


def _init_sep_stage(key, ci, co):
    k1, k2, k3, k4 = jax.random.split(key, 4)
    return dict(
        w_dw=0.3 * jax.random.normal(k1, (ci, 1, 3, 3), jnp.float32),
        bn_a=_init_bn(k2, ci),
        w_pw=0.3 * jax.random.normal(k3, (co, ci, 1, 1), jnp.float32),
        bn_b=_init_bn(k4, co))


if __name__ == "__main__":
    key = jax.random.PRNGKey(0)
    k_x, k_s1, k_s2, k_s3, k_sk, k_bn = jax.random.split(key, 6)

    N, inplanes, planes, H, W = 2, 4, 8, 16, 16
    p4 = planes // 4

    x = jax.random.normal(k_x, (N, inplanes, H, W), dtype=jnp.float32)
    params = {
        "stages": [
            _init_sep_stage(k_s1, inplanes, p4),
            _init_sep_stage(k_s2, p4, p4),
            _init_sep_stage(k_s3, p4, planes),
        ],
        # planes != inplanes -> conv skip + BN (as in the PyTorch Block)
        "skip": {
            "w": 0.3 * jax.random.normal(k_sk, (planes, inplanes, 1, 1),
                                         jnp.float32),
            "bn": _init_bn(k_bn, planes),
        },
    }

    out = block_forward(x, params, start_with_relu=True)
    out = jax.block_until_ready(out)

    ref = _ref_block(x, params, start_with_relu=True)
    assert out.shape == (N, planes, H, W)
    max_err = float(jnp.max(jnp.abs(out - ref)))
    assert jnp.allclose(out, ref, rtol=1e-3, atol=1e-3), max_err

    print("KERNEL_OK")
</pallas_src>

<mosaic_0001>
module attributes {stable_mosaic.version = 11 : i64} {
  func.func @_stage_kernel(%arg0: i32, %arg1: memref<1x4x256xf32, #tpu.memory_space<vmem>>, %arg2: memref<4x9xf32, #tpu.memory_space<vmem>>, %arg3: memref<2x4xf32, #tpu.memory_space<vmem>>, %arg4: memref<2x1xf32, #tpu.memory_space<vmem>>, %arg5: memref<1x2x256xf32, #tpu.memory_space<vmem>>) attributes {dimension_semantics = [#tpu.dimension_semantics<parallel>], iteration_bounds = array<i64: 2>, scalar_prefetch = 0 : i64, scratch_operands = 0 : i64, tpu.core_type = #tpu.core_type<tc>, window_params = [{transform_indices = @transform_0, window_bounds = array<i64: 1, 4, 256>}, {pipeline_mode = #tpu.pipeline_mode<synchronous>, transform_indices = @transform_1, window_bounds = array<i64: 4, 9>}, {pipeline_mode = #tpu.pipeline_mode<synchronous>, transform_indices = @transform_2, window_bounds = array<i64: 2, 4>}, {pipeline_mode = #tpu.pipeline_mode<synchronous>, transform_indices = @transform_3, window_bounds = array<i64: 2, 1>}, {transform_indices = @transform_4, window_bounds = array<i64: 1, 2, 256>}]} {
    %c0 = arith.constant 0 : index
    %c0_0 = arith.constant 0 : index
    %c0_1 = arith.constant 0 : index
    %0 = vector.load %arg1[%c0, %c0_0, %c0_1] : memref<1x4x256xf32, #tpu.memory_space<vmem>>, vector<1x4x256xf32>
    %1 = vector.shape_cast %0 : vector<1x4x256xf32> to vector<4x256xf32>
    %c0_2 = arith.constant 0 : index
    %c0_3 = arith.constant 0 : index
    %2 = vector.load %arg2[%c0_2, %c0_3] : memref<4x9xf32, #tpu.memory_space<vmem>>, vector<4x9xf32>
    %c0_4 = arith.constant 0 : index
    %c0_5 = arith.constant 0 : index
    %3 = vector.load %arg3[%c0_4, %c0_5] : memref<2x4xf32, #tpu.memory_space<vmem>>, vector<2x4xf32>
    %c0_6 = arith.constant 0 : index
    %c0_7 = arith.constant 0 : index
    %4 = vector.load %arg4[%c0_6, %c0_7] : memref<2x1xf32, #tpu.memory_space<vmem>>, vector<2x1xf32>
    %cst = arith.constant 0.000000e+00 : f32
    %5 = vector.broadcast %cst : f32 to vector<4x256xf32>
    %6 = arith.maximumf %1, %5 : vector<4x256xf32>
    %7 = tpu.iota {dimensions = array<i32: 1>} : vector<1x256xi32>
    %c15_i32 = arith.constant 15 : i32
    %8 = vector.broadcast %c15_i32 : i32 to vector<1x256xi32>
    %9 = arith.andi %7, %8 : vector<1x256xi32>
    %c0_i32 = arith.constant 0 : i32
    %10 = vector.broadcast %c0_i32 : i32 to vector<1x256xi32>
    %11 = arith.cmpi sgt, %9, %10 : vector<1x256xi32>
    %c15_i32_8 = arith.constant 15 : i32
    %12 = vector.broadcast %c15_i32_8 : i32 to vector<1x256xi32>
    %13 = arith.cmpi slt, %9, %12 : vector<1x256xi32>
    %cst_9 = arith.constant 0.000000e+00 : f32
    %14 = vector.broadcast %cst_9 : f32 to vector<4x256xf32>
    %cst_10 = arith.constant 0.000000e+00 : f32
    %15 = vector.broadcast %cst_10 : f32 to vector<4x17xf32>
    %16 = vector.extract_strided_slice %6 {offsets = [0, 0], sizes = [4, 239], strides = [1, 1]} : vector<4x256xf32> to vector<4x239xf32>
    %17 = tpu.concatenate %15, %16 in 1 : vector<4x17xf32>, vector<4x239xf32> -> vector<4x256xf32>
    %cst_11 = arith.constant 0.000000e+00 : f32
    %18 = vector.shape_cast %11 : vector<1x256xi1> to vector<1x256xi1>
    %19 = vector.broadcast %18 : vector<1x256xi1> to vector<4x256xi1>
    %20 = vector.broadcast %cst_11 : f32 to vector<4x256xf32>
    %21 = arith.select %19, %17, %20 : vector<4x256xi1>, vector<4x256xf32>
    %22 = vector.extract_strided_slice %2 {offsets = [0, 0], sizes = [4, 1], strides = [1, 1]} : vector<4x9xf32> to vector<4x1xf32>
    %23 = vector.broadcast %22 : vector<4x1xf32> to vector<4x256xf32>
    %24 = arith.mulf %21, %23 : vector<4x256xf32>
    %25 = arith.addf %14, %24 : vector<4x256xf32>
    %cst_12 = arith.constant 0.000000e+00 : f32
    %26 = vector.broadcast %cst_12 : f32 to vector<4x16xf32>
    %27 = vector.extract_strided_slice %6 {offsets = [0, 0], sizes = [4, 240], strides = [1, 1]} : vector<4x256xf32> to vector<4x240xf32>
    %28 = tpu.concatenate %26, %27 in 1 : vector<4x16xf32>, vector<4x240xf32> -> vector<4x256xf32>
    %29 = vector.extract_strided_slice %2 {offsets = [0, 1], sizes = [4, 1], strides = [1, 1]} : vector<4x9xf32> to vector<4x1xf32>
    %30 = vector.broadcast %29 : vector<4x1xf32> to vector<4x256xf32>
    %31 = arith.mulf %28, %30 : vector<4x256xf32>
    %32 = arith.addf %25, %31 : vector<4x256xf32>
    %cst_13 = arith.constant 0.000000e+00 : f32
    %33 = vector.broadcast %cst_13 : f32 to vector<4x15xf32>
    %34 = vector.extract_strided_slice %6 {offsets = [0, 0], sizes = [4, 241], strides = [1, 1]} : vector<4x256xf32> to vector<4x241xf32>
    %35 = tpu.concatenate %33, %34 in 1 : vector<4x15xf32>, vector<4x241xf32> -> vector<4x256xf32>
    %cst_14 = arith.constant 0.000000e+00 : f32
    %36 = vector.shape_cast %13 : vector<1x256xi1> to vector<1x256xi1>
    %37 = vector.broadcast %36 : vector<1x256xi1> to vector<4x256xi1>
    %38 = vector.broadcast %cst_14 : f32 to vector<4x256xf32>
    %39 = arith.select %37, %35, %38 : vector<4x256xi1>, vector<4x256xf32>
    %40 = vector.extract_strided_slice %2 {offsets = [0, 2], sizes = [4, 1], strides = [1, 1]} : vector<4x9xf32> to vector<4x1xf32>
    %41 = vector.broadcast %40 : vector<4x1xf32> to vector<4x256xf32>
    %42 = arith.mulf %39, %41 : vector<4x256xf32>
    %43 = arith.addf %32, %42 : vector<4x256xf32>
    %cst_15 = arith.constant 0.000000e+00 : f32
    %44 = vector.broadcast %cst_15 : f32 to vector<4x1xf32>
    %45 = vector.extract_strided_slice %6 {offsets = [0, 0], sizes = [4, 255], strides = [1, 1]} : vector<4x256xf32> to vector<4x255xf32>
    %46 = tpu.concatenate %44, %45 in 1 : vector<4x1xf32>, vector<4x255xf32> -> vector<4x256xf32>
    %cst_16 = arith.constant 0.000000e+00 : f32
    %47 = vector.shape_cast %11 : vector<1x256xi1> to vector<1x256xi1>
    %48 = vector.broadcast %47 : vector<1x256xi1> to vector<4x256xi1>
    %49 = vector.broadcast %cst_16 : f32 to vector<4x256xf32>
    %50 = arith.select %48, %46, %49 : vector<4x256xi1>, vector<4x256xf32>
    %51 = vector.extract_strided_slice %2 {offsets = [0, 3], sizes = [4, 1], strides = [1, 1]} : vector<4x9xf32> to vector<4x1xf32>
    %52 = vector.broadcast %51 : vector<4x1xf32> to vector<4x256xf32>
    %53 = arith.mulf %50, %52 : vector<4x256xf32>
    %54 = arith.addf %43, %53 : vector<4x256xf32>
    %55 = vector.extract_strided_slice %2 {offsets = [0, 4], sizes = [4, 1], strides = [1, 1]} : vector<4x9xf32> to vector<4x1xf32>
    %56 = vector.broadcast %55 : vector<4x1xf32> to vector<4x256xf32>
    %57 = arith.mulf %6, %56 : vector<4x256xf32>
    %58 = arith.addf %54, %57 : vector<4x256xf32>
    %cst_17 = arith.constant 0.000000e+00 : f32
    %59 = vector.broadcast %cst_17 : f32 to vector<4x1xf32>
    %60 = vector.extract_strided_slice %6 {offsets = [0, 1], sizes = [4, 255], strides = [1, 1]} : vector<4x256xf32> to vector<4x255xf32>
    %61 = tpu.concatenate %60, %59 in 1 : vector<4x255xf32>, vector<4x1xf32> -> vector<4x256xf32>
    %cst_18 = arith.constant 0.000000e+00 : f32
    %62 = vector.shape_cast %13 : vector<1x256xi1> to vector<1x256xi1>
    %63 = vector.broadcast %62 : vector<1x256xi1> to vector<4x256xi1>
    %64 = vector.broadcast %cst_18 : f32 to vector<4x256xf32>
    %65 = arith.select %63, %61, %64 : vector<4x256xi1>, vector<4x256xf32>
    %66 = vector.extract_strided_slice %2 {offsets = [0, 5], sizes = [4, 1], strides = [1, 1]} : vector<4x9xf32> to vector<4x1xf32>
    %67 = vector.broadcast %66 : vector<4x1xf32> to vector<4x256xf32>
    %68 = arith.mulf %65, %67 : vector<4x256xf32>
    %69 = arith.addf %58, %68 : vector<4x256xf32>
    %cst_19 = arith.constant 0.000000e+00 : f32
    %70 = vector.broadcast %cst_19 : f32 to vector<4x15xf32>
    %71 = vector.extract_strided_slice %6 {offsets = [0, 15], sizes = [4, 241], strides = [1, 1]} : vector<4x256xf32> to vector<4x241xf32>
    %72 = tpu.concatenate %71, %70 in 1 : vector<4x241xf32>, vector<4x15xf32> -> vector<4x256xf32>
    %cst_20 = arith.constant 0.000000e+00 : f32
    %73 = vector.shape_cast %11 : vector<1x256xi1> to vector<1x256xi1>
    %74 = vector.broadcast %73 : vector<1x256xi1> to vector<4x256xi1>
    %75 = vector.broadcast %cst_20 : f32 to vector<4x256xf32>
    %76 = arith.select %74, %72, %75 : vector<4x256xi1>, vector<4x256xf32>
    %77 = vector.extract_strided_slice %2 {offsets = [0, 6], sizes = [4, 1], strides = [1, 1]} : vector<4x9xf32> to vector<4x1xf32>
    %78 = vector.broadcast %77 : vector<4x1xf32> to vector<4x256xf32>
    %79 = arith.mulf %76, %78 : vector<4x256xf32>
    %80 = arith.addf %69, %79 : vector<4x256xf32>
    %cst_21 = arith.constant 0.000000e+00 : f32
    %81 = vector.broadcast %cst_21 : f32 to vector<4x16xf32>
    %82 = vector.extract_strided_slice %6 {offsets = [0, 16], sizes = [4, 240], strides = [1, 1]} : vector<4x256xf32> to vector<4x240xf32>
    %83 = tpu.concatenate %82, %81 in 1 : vector<4x240xf32>, vector<4x16xf32> -> vector<4x256xf32>
    %84 = vector.extract_strided_slice %2 {offsets = [0, 7], sizes = [4, 1], strides = [1, 1]} : vector<4x9xf32> to vector<4x1xf32>
    %85 = vector.broadcast %84 : vector<4x1xf32> to vector<4x256xf32>
    %86 = arith.mulf %83, %85 : vector<4x256xf32>
    %87 = arith.addf %80, %86 : vector<4x256xf32>
    %cst_22 = arith.constant 0.000000e+00 : f32
    %88 = vector.broadcast %cst_22 : f32 to vector<4x17xf32>
    %89 = vector.extract_strided_slice %6 {offsets = [0, 17], sizes = [4, 239], strides = [1, 1]} : vector<4x256xf32> to vector<4x239xf32>
    %90 = tpu.concatenate %89, %88 in 1 : vector<4x239xf32>, vector<4x17xf32> -> vector<4x256xf32>
    %cst_23 = arith.constant 0.000000e+00 : f32
    %91 = vector.shape_cast %13 : vector<1x256xi1> to vector<1x256xi1>
    %92 = vector.broadcast %91 : vector<1x256xi1> to vector<4x256xi1>
    %93 = vector.broadcast %cst_23 : f32 to vector<4x256xf32>
    %94 = arith.select %92, %90, %93 : vector<4x256xi1>, vector<4x256xf32>
    %95 = vector.extract_strided_slice %2 {offsets = [0, 8], sizes = [4, 1], strides = [1, 1]} : vector<4x9xf32> to vector<4x1xf32>
    %96 = vector.broadcast %95 : vector<4x1xf32> to vector<4x256xf32>
    %97 = arith.mulf %94, %96 : vector<4x256xf32>
    %98 = arith.addf %87, %97 : vector<4x256xf32>
    %cst_24 = arith.constant 0.000000e+00 : f32
    %99 = vector.broadcast %cst_24 : f32 to vector<2x256xf32>
    %100 = vector.broadcast %4 : vector<2x1xf32> to vector<2x256xf32>
    %101 = arith.addf %99, %100 : vector<2x256xf32>
    %102 = vector.extract_strided_slice %98 {offsets = [0, 0], sizes = [1, 256], strides = [1, 1]} : vector<4x256xf32> to vector<1x256xf32>
    %103 = vector.extract_strided_slice %3 {offsets = [0, 0], sizes = [2, 1], strides = [1, 1]} : vector<2x4xf32> to vector<2x1xf32>
    %104 = vector.broadcast %102 : vector<1x256xf32> to vector<2x256xf32>
    %105 = vector.broadcast %103 : vector<2x1xf32> to vector<2x256xf32>
    %106 = arith.mulf %104, %105 : vector<2x256xf32>
    %107 = arith.addf %101, %106 : vector<2x256xf32>
    %108 = vector.extract_strided_slice %98 {offsets = [1, 0], sizes = [1, 256], strides = [1, 1]} : vector<4x256xf32> to vector<1x256xf32>
    %109 = vector.extract_strided_slice %3 {offsets = [0, 1], sizes = [2, 1], strides = [1, 1]} : vector<2x4xf32> to vector<2x1xf32>
    %110 = vector.broadcast %108 : vector<1x256xf32> to vector<2x256xf32>
    %111 = vector.broadcast %109 : vector<2x1xf32> to vector<2x256xf32>
    %112 = arith.mulf %110, %111 : vector<2x256xf32>
    %113 = arith.addf %107, %112 : vector<2x256xf32>
    %114 = vector.extract_strided_slice %98 {offsets = [2, 0], sizes = [1, 256], strides = [1, 1]} : vector<4x256xf32> to vector<1x256xf32>
    %115 = vector.extract_strided_slice %3 {offsets = [0, 2], sizes = [2, 1], strides = [1, 1]} : vector<2x4xf32> to vector<2x1xf32>
    %116 = vector.broadcast %114 : vector<1x256xf32> to vector<2x256xf32>
    %117 = vector.broadcast %115 : vector<2x1xf32> to vector<2x256xf32>
    %118 = arith.mulf %116, %117 : vector<2x256xf32>
    %119 = arith.addf %113, %118 : vector<2x256xf32>
    %120 = vector.extract_strided_slice %98 {offsets = [3, 0], sizes = [1, 256], strides = [1, 1]} : vector<4x256xf32> to vector<1x256xf32>
    %121 = vector.extract_strided_slice %3 {offsets = [0, 3], sizes = [2, 1], strides = [1, 1]} : vector<2x4xf32> to vector<2x1xf32>
    %122 = vector.broadcast %120 : vector<1x256xf32> to vector<2x256xf32>
    %123 = vector.broadcast %121 : vector<2x1xf32> to vector<2x256xf32>
    %124 = arith.mulf %122, %123 : vector<2x256xf32>
    %125 = arith.addf %119, %124 : vector<2x256xf32>
    %c0_25 = arith.constant 0 : index
    %c0_26 = arith.constant 0 : index
    %c0_27 = arith.constant 0 : index
    %126 = vector.load %arg5[%c0_25, %c0_26, %c0_27] : memref<1x2x256xf32, #tpu.memory_space<vmem>>, vector<1x2x256xf32>
    %127 = vector.shape_cast %126 : vector<1x2x256xf32> to vector<2x256xf32>
    %128 = vector.shape_cast %125 : vector<2x256xf32> to vector<1x2x256xf32>
    tpu.vector_store %arg5[%c0_25, %c0_26, %c0_27], %128 {strides = array<i32>} : memref<1x2x256xf32, #tpu.memory_space<vmem>>, vector<1x2x256xf32>,
    return
  }
  func.func @transform_0(%arg0: i32) -> (i32, i32, i32) {
    %c0_i32 = arith.constant 0 : i32
    %c0_i32_0 = arith.constant 0 : i32
    %c0_i32_1 = arith.constant 0 : i32
    return %arg0, %c0_i32, %c0_i32_0 : i32, i32, i32
  }
  func.func @transform_1(%arg0: i32) -> (i32, i32) {
    %c0_i32 = arith.constant 0 : i32
    %c0_i32_0 = arith.constant 0 : i32
    %c0_i32_1 = arith.constant 0 : i32
    return %c0_i32, %c0_i32_0 : i32, i32
  }
  func.func @transform_2(%arg0: i32) -> (i32, i32) {
    %c0_i32 = arith.constant 0 : i32
    %c0_i32_0 = arith.constant 0 : i32
    %c0_i32_1 = arith.constant 0 : i32
    return %c0_i32, %c0_i32_0 : i32, i32
  }
  func.func @transform_3(%arg0: i32) -> (i32, i32) {
    %c0_i32 = arith.constant 0 : i32
    %c0_i32_0 = arith.constant 0 : i32
    %c0_i32_1 = arith.constant 0 : i32
    return %c0_i32, %c0_i32_0 : i32, i32
  }
  func.func @transform_4(%arg0: i32) -> (i32, i32, i32) {
    %c0_i32 = arith.constant 0 : i32
    %c0_i32_0 = arith.constant 0 : i32
    %c0_i32_1 = arith.constant 0 : i32
    return %arg0, %c0_i32, %c0_i32_0 : i32, i32, i32
  }
}

</mosaic_0001>

<llo_original>
// kernel: tpu_custom_call.1
$region0: #{tpu_custom_call.1}
  #allocation0 [shape = 'u32[]', space=smem, size = 0x4, offset = 0x4, fixed_abs, tag = 'smem constant byte address 0x4 - core index']
  #allocation1 [shape = 'u32[72,128]{1,0:T(1,128)}', space=vmem, size = 0x9000, scoped, tag = 'internal scratch']
  %s0 = inlined_call_operand.hbm [shape: f32[2,4,256], index: 0, kind: input, shape index: {}]
  %s1 = inlined_call_operand.hbm [shape: f32[4,9], index: 1, kind: input, shape index: {}]
  %s2 = inlined_call_operand.vmem [shape: f32[2,4], index: 2, kind: input, shape index: {}]
  %s3 = inlined_call_operand.vmem [shape: f32[2,1], index: 3, kind: input, shape index: {}]
  %s4 = inlined_call_operand.hbm [shape: f32[2,2,256], index: 4, kind: output, shape index: {}]
  %s5 = sld [smem:[#allocation0]]
  $region57: #{tpu_custom_call.1} parent=0
    _
  %s7 = ssub.s32 1, %s5
  %s8 = scalar_select 0, %s7, %s5
  $region1: #{tpu_custom_call.1} parent=0
    #allocation2 [shape = 'u8[8192]{0}', space=vmem, size = 0x2000, scoped, tag = 'input window, operand 0']
    #allocation3 [shape = 's32[2]{0}', space=sflag, size = 0x8, scoped, tag = 'scoped memory for tpu_custom_call.1']
    #allocation4 [shape = 's32[2]{0}', space=sflag, size = 0x8, scoped, tag = 'scoped memory for tpu_custom_call.1']
    #allocation5 [shape = 'u8[2048]{0}', space=vmem, size = 0x800, scoped, tag = 'input window, operand 1, single buffered']
    #allocation6 [shape = 's32[1]{0}', space=sflag, size = 0x4, scoped, tag = 'scoped memory for tpu_custom_call.1']
    #allocation7 [shape = 'u8[4096]{0}', space=vmem, size = 0x1000, scoped, tag = 'output window, operand 0']
    %9 = vsyncpa [#allocation3], 0
    %s10 = scalar_lea.sflag [#allocation3], 1
    %11 = vsyncpa %s10, 0
    %12 = vsyncpa [#allocation6], 0
    %13 = vsyncpa [#allocation4], 0
    %s14 = scalar_lea.sflag [#allocation4], 1
    %15 = vsyncpa %s14, 0
    loop: start=0, step=1, limit=4
    $region2: #{tpu_custom_call.1} parent=1 // loop_pre_header
      _
    $region3: #{tpu_custom_call.1} parent=1 // loop_header
      %s17 = sphi 0, %s21
      %p18 = scmp.ge.s32.totalorder %s17, 4
      %s27 = sphi 0, %s29
      %s30 = sphi 0, %s27
      %s31 = sphi 0, %s30
      %s47 = sphi 0, %s31
      %s51 = sphi 0, %s51
      %s53 = sphi 0, %s51
      %s54 = sphi 0, %s53
      %s68 = sphi 0, %s54
      %s72 = sphi 0, %s72
      %s74 = sphi 0, %s72
      %s75 = sphi 0, %s74
      %s89 = sphi 0, %s75
      %s93 = sphi 0, %s93
      %s95 = sphi 0, %s93
      %s96 = sphi 0, %s95
      %s110 = sphi 0, %s96
      %s116 = sphi 0, %s118
      %s119 = sphi 0, %s116
      %s120 = sphi 0, %s119
      %s136 = sphi 0, %s120
    $region4: #{tpu_custom_call.1} parent=1 // loop_header_branch
      %20 = sbr.rel (%p18) target = $region8
    $region5: #{tpu_custom_call.1} parent=1 // loop_body
      %s22 = ssub.s32 %s17, 1
      %s23 = ssub.s32 %s17, 2
      %s24 = sadd.s32 %s17, 1
      %s25 = ssub.s32 %s17, %s24
      %p26 = scmp.eq.s32.totalorder %s25, 0
      %s28 = sadd.s32 %s27, 1
      %s29 = scalar_select %p26, %s27, %s28
      %p32 = pneg %p26
      %p33 = scmp.eq.s32.totalorder %s17, 1
      %p34 = por %p32, %p33
      %p35 = scmp.ne.s32.totalorder %s27, %s30
      %p36 = scmp.eq.s32.totalorder %s17, 0
      %p37 = por %p35, %p36
      %p38 = scmp.ne.s32.totalorder %s27, %s30
      %p39 = scmp.eq.s32.totalorder %s22, 1
      %p40 = por %p38, %p39
      %p41 = scmp.ne.s32.totalorder %s30, %s31
      %p42 = scmp.eq.s32.totalorder %s22, 0
      %p43 = por %p41, %p42
      %p44 = scmp.ne.s32.totalorder %s30, %s31
      %p45 = scmp.eq.s32.totalorder %s23, 1
      %p46 = por %p44, %p45
      %p48 = scmp.ne.s32.totalorder %s31, %s47
      %p49 = scmp.eq.s32.totalorder %s23, 0
      %p50 = por %p48, %p49
      %s52 = sadd.s32 %s51, 1
      %p55 = scmp.eq.s32.totalorder %s17, 1
      %p56 = scmp.ne.s32.totalorder %s51, %s53
      %p57 = scmp.eq.s32.totalorder %s17, 0
      %p58 = por %p56, %p57
      %p59 = scmp.ne.s32.totalorder %s51, %s53
      %p60 = scmp.eq.s32.totalorder %s22, 1
      %p61 = por %p59, %p60
      %p62 = scmp.ne.s32.totalorder %s53, %s54
      %p63 = scmp.eq.s32.totalorder %s22, 0
      %p64 = por %p62, %p63
      %p65 = scmp.ne.s32.totalorder %s53, %s54
      %p66 = scmp.eq.s32.totalorder %s23, 1
      %p67 = por %p65, %p66
      %p69 = scmp.ne.s32.totalorder %s54, %s68
      %p70 = scmp.eq.s32.totalorder %s23, 0
      %p71 = por %p69, %p70
      %s73 = sadd.s32 %s72, 1
      %p76 = scmp.eq.s32.totalorder %s17, 1
      %p77 = scmp.ne.s32.totalorder %s72, %s74
      %p78 = scmp.eq.s32.totalorder %s17, 0
      %p79 = por %p77, %p78
      %p80 = scmp.ne.s32.totalorder %s72, %s74
      %p81 = scmp.eq.s32.totalorder %s22, 1
      %p82 = por %p80, %p81
      %p83 = scmp.ne.s32.totalorder %s74, %s75
      %p84 = scmp.eq.s32.totalorder %s22, 0
      %p85 = por %p83, %p84
      %p86 = scmp.ne.s32.totalorder %s74, %s75
      %p87 = scmp.eq.s32.totalorder %s23, 1
      %p88 = por %p86, %p87
      %p90 = scmp.ne.s32.totalorder %s75, %s89
      %p91 = scmp.eq.s32.totalorder %s23, 0
      %p92 = por %p90, %p91
      %s94 = sadd.s32 %s93, 1
      %p97 = scmp.eq.s32.totalorder %s17, 1
      %p98 = scmp.ne.s32.totalorder %s93, %s95
      %p99 = scmp.eq.s32.totalorder %s17, 0
      %p100 = por %p98, %p99
      %p101 = scmp.ne.s32.totalorder %s93, %s95
      %p102 = scmp.eq.s32.totalorder %s22, 1
      %p103 = por %p101, %p102
      %p104 = scmp.ne.s32.totalorder %s95, %s96
      %p105 = scmp.eq.s32.totalorder %s22, 0
      %p106 = por %p104, %p105
      %p107 = scmp.ne.s32.totalorder %s95, %s96
      %p108 = scmp.eq.s32.totalorder %s23, 1
      %p109 = por %p107, %p108
      %p111 = scmp.ne.s32.totalorder %s96, %s110
      %p112 = scmp.eq.s32.totalorder %s23, 0
      %p113 = por %p111, %p112
      %s114 = ssub.s32 %s17, %s24
      %p115 = scmp.eq.s32.totalorder %s114, 0
      %s117 = sadd.s32 %s116, 1
      %s118 = scalar_select %p115, %s116, %s117
      %p121 = pneg %p115
      %p122 = scmp.eq.s32.totalorder %s17, 1
      %p123 = por %p121, %p122
      %p124 = scmp.ne.s32.totalorder %s116, %s119
      %p125 = scmp.eq.s32.totalorder %s17, 0
      %p126 = por %p124, %p125
      %p127 = scmp.ne.s32.totalorder %s116, %s119
      %p128 = scmp.eq.s32.totalorder %s22, 1
      %p129 = por %p127, %p128
      %p130 = scmp.ne.s32.totalorder %s119, %s120
      %p131 = scmp.eq.s32.totalorder %s22, 0
      %p132 = por %p130, %p131
      %p133 = scmp.ne.s32.totalorder %s119, %s120
      %p134 = scmp.eq.s32.totalorder %s23, 1
      %p135 = por %p133, %p134
      %p137 = scmp.ne.s32.totalorder %s120, %s136
      %p138 = scmp.eq.s32.totalorder %s23, 0
      %p139 = por %p137, %p138
      %p140 = scmp.le.s32.totalorder 1, %s17
      %p141 = scmp.lt.s32.totalorder %s17, 3
      %p142 = pnand %p140, %p141
      %p143 = pneg %p142
      // Predicated region
      $region9: #{tpu_custom_call.1} parent=5 // pred_check
        _
      $region10: #{tpu_custom_call.1} parent=5 // pred_check_branch
        %145 = sbr.rel (%p142) target = $region12
      $region11: #{tpu_custom_call.1} parent=5 // pred_region
        %s146 = ssub.s32 %s17, 1
        // Predicated region
        $region13: #{tpu_custom_call.1} parent=11 // pred_check
          %p147 = pneg %p64
        $region14: #{tpu_custom_call.1} parent=11 // pred_check_branch
          %149 = sbr.rel (%p147) target = $region16
        $region15: #{tpu_custom_call.1} parent=11 // pred_region
          %151 = vsyncadd [#allocation6], 0
          %s153 = sshll.u32 %s1, 4
          %s154 = int_to_ptr.hbm [resolvable:$true] %s153
          %s155 = sshll.u32 [#allocation5], 4
          %s156 = int_to_ptr.vmem [resolvable:$true] %s155
          %158 = dma.hbm_to_vmem [thread:$0]  %s154, 64, %s156, [#allocation6]
        $region16: #{tpu_custom_call.1} parent=11 // pred_fallthru
          _
        // Predicated region
        $region17: #{tpu_custom_call.1} parent=11 // pred_check
          %p159 = pneg %p85
        $region18: #{tpu_custom_call.1} parent=11 // pred_check_branch
          %161 = sbr.rel (%p159) target = $region20
        $region19: #{tpu_custom_call.1} parent=11 // pred_region
          _
        $region20: #{tpu_custom_call.1} parent=11 // pred_fallthru
          _
        // Predicated region
        $region21: #{tpu_custom_call.1} parent=11 // pred_check
          %p162 = pneg %p106
        $region22: #{tpu_custom_call.1} parent=11 // pred_check_branch
          %164 = sbr.rel (%p162) target = $region24
        $region23: #{tpu_custom_call.1} parent=11 // pred_region
          _
        $region24: #{tpu_custom_call.1} parent=11 // pred_fallthru
          _
      $region12: #{tpu_custom_call.1} parent=5 // pred_fallthru
        _
      %p165 = scmp.lt.s32.totalorder %s17, 2
      // Predicated region
      $region25: #{tpu_custom_call.1} parent=5 // pred_check
        %p166 = pneg %p165
      $region26: #{tpu_custom_call.1} parent=5 // pred_check_branch
        %168 = sbr.rel (%p166) target = $region28
      $region27: #{tpu_custom_call.1} parent=5 // pred_region
        // Predicated region
        $region29: #{tpu_custom_call.1} parent=27 // pred_check
          %p169 = pneg %p37
        $region30: #{tpu_custom_call.1} parent=27 // pred_check_branch
          %171 = sbr.rel (%p169) target = $region32
        $region31: #{tpu_custom_call.1} parent=27 // pred_region
          %s172 = sand.u32 %s27, 1
          %s173 = scalar_lea.sflag [#allocation3], %s172
          %s174 = sand.u32 %s27, 1
          %s175 = smul.addr %s174, 8
          %s176 = scalar_lea.vmem [#allocation2], %s175
          %178 = vsyncadd %s173, 0
          %s179 = smul.addr %s17, 2
          %s180 = smul.addr %s179, 4
          %s181 = scalar_lea.hbm %s0, %s180
          %s183 = sshll.u32 %s181, 4
          %s184 = int_to_ptr.hbm [resolvable:$true] %s183
          %s185 = sshll.u32 %s176, 4
          %s186 = int_to_ptr.vmem [resolvable:$true] %s185
          %188 = dma.hbm_to_vmem [thread:$0]  %s184, 128, %s186, %s173
        $region32: #{tpu_custom_call.1} parent=27 // pred_fallthru
          _
      $region28: #{tpu_custom_call.1} parent=5 // pred_fallthru
        _
      %p189 = scmp.le.s32.totalorder 1, %s17
      %p190 = scmp.lt.s32.totalorder %s17, 3
      %p191 = pnand %p189, %p190
      %p192 = pneg %p191
      // Predicated region
      $region33: #{tpu_custom_call.1} parent=5 // pred_check
        _
      $region34: #{tpu_custom_call.1} parent=5 // pred_check_branch
        %194 = sbr.rel (%p191) target = $region36
      $region35: #{tpu_custom_call.1} parent=5 // pred_region
        %s195 = ssub.s32 %s17, 1
        %s196 = sand.u32 %s30, 1
        %s197 = scalar_lea.sflag [#allocation3], %s196
        %s198 = sand.u32 %s30, 1
        %s199 = smul.addr %s198, 8
        %s200 = scalar_lea.vmem [#allocation2], %s199
        // Predicated region
        $region37: #{tpu_custom_call.1} parent=35 // pred_check
          %p201 = pneg %p43
        $region38: #{tpu_custom_call.1} parent=35 // pred_check_branch
          %203 = sbr.rel (%p201) target = $region40
        $region39: #{tpu_custom_call.1} parent=35 // pred_region
          %205 = dma.done %s197, 128
        $region40: #{tpu_custom_call.1} parent=35 // pred_fallthru
          _
        // Predicated region
        $region41: #{tpu_custom_call.1} parent=35 // pred_check
          %p206 = pneg %p64
        $region42: #{tpu_custom_call.1} parent=35 // pred_check_branch
          %208 = sbr.rel (%p206) target = $region44
        $region43: #{tpu_custom_call.1} parent=35 // pred_region
          %210 = dma.done [#allocation6], 64
        $region44: #{tpu_custom_call.1} parent=35 // pred_fallthru
          _
        %s211 = sand.u32 %s30, 1
        %s212 = scalar_lea.sflag [#allocation3], %s211
        %s213 = sand.u32 %s30, 1
        %s214 = smul.addr %s213, 8
        %s215 = scalar_lea.vmem [#allocation2], %s214
        %p216 = pneg %p43
        %p217 = pneg %p40
        %p218 = pneg %p64
        %p219 = pneg %p61
        %p220 = pneg %p85
        %p221 = pneg %p82
        %p222 = pneg %p106
        %p223 = pneg %p103
        %p224 = pneg %p132
        %p225 = pneg %p129
        %s226 = sand.u32 %s119, 1
        %s227 = scalar_lea.sflag [#allocation4], %s226
        %s228 = sand.u32 %s119, 1
        %s229 = smul.addr %s228, 4
        %s230 = scalar_lea.vmem [#allocation7], %s229
        %v231 = vld [vmem:[%s200] sm:$0xff]
        %v232 = vld [vmem:[#allocation5] sm:$0xf]
        %v233 = vld [vmem:[%s2] sm:$0x3]
        %v234 = vld [vmem:[%s3] sm:$0x3]
        %v235 = vmax.f32 %v231, 0.0
        %v236 = vlaneseq
        %v237 = vand.u32 %v236, 127
        %v238 = vadd.s32 %v237, 128
        %v239 = vand.u32 %v237, 15
        %v240 = vand.u32 %v238, 15
        %vm241 = vcmp.gt.s32.totalorder %v239, 0
        %vm242 = vcmp.gt.s32.totalorder %v240, 0
        %vm243 = vcmp.lt.s32.totalorder %v239, 15
        %vm244 = vcmp.lt.s32.totalorder %v240, 15
        %246 = vst [vmem:[#allocation1] ss:$2 sm:$0xff] %v235
        %v247 = vld.sshfl [vmem:[#allocation1] sm:$0xff pattern:$0x75316420]
        %v248 = vld.sshfl [vmem:[#allocation1 + $0x8] sm:$0xff pattern:$0x75316420]
        %249 = vrot.lane.b32.xlu0 %v247, 17
        %v250 = vpop.permute.xlu0 %249
        %251 = vrot.lane.b32.xlu0 %v248, 17
        %v252 = vpop.permute.xlu0 %251
        %vm253 = vcmask 138240
        %v254 = vsel %vm253, %v250, %v252
        %v257 = vsel %vm253, 0.0, %v250
        %v258 = vsel %vm241, 1, 0
        %v259 = vsel %vm242, 1, 0
        %vm260 = vcmp.eq.s32.totalorder %v258, 1
        %vm261 = vcmp.eq.s32.totalorder %v259, 1
        %v262 = vsel %vm260, %v257, 0.0
        %v263 = vsel %vm261, %v254, 0.0
        %265 = vset.pattern.permute.xlu0 0
        %266 = vperm.xlu0 %265, %v232
        %v267 = vpop.permute.xlu0 %266
        %v269 = vmul.f32 %v262, %v267
        %v270 = vmul.f32 %v263, %v267
        %v271 = vadd.f32 %v269, 0.0
        %v272 = vadd.f32 %v270, 0.0
        %273 = vst [vmem:[#allocation1] ss:$2 sm:$0xff] %v235
        %v274 = vld.sshfl [vmem:[#allocation1] sm:$0xff pattern:$0x75316420]
        %v275 = vld.sshfl [vmem:[#allocation1 + $0x8] sm:$0xff pattern:$0x75316420]
        %276 = vrot.lane.b32.xlu0 %v274, 16
        %v277 = vpop.permute.xlu0 %276
        %278 = vrot.lane.b32.xlu0 %v275, 16
        %v279 = vpop.permute.xlu0 %278
        %vm280 = vcmask 130048
        %v281 = vsel %vm280, %v277, %v279
        %v284 = vsel %vm280, 0.0, %v277
        %285 = vset.pattern.permute.xlu0 1
        %286 = vperm.xlu0 %285, %v232
        %v287 = vpop.permute.xlu0 %286
        %v289 = vmul.f32 %v284, %v287
        %v290 = vmul.f32 %v281, %v287
        %v291 = vadd.f32 %v271, %v289
        %v292 = vadd.f32 %v272, %v290
        %293 = vst [vmem:[#allocation1] ss:$2 sm:$0xff] %v235
        %v294 = vld.sshfl [vmem:[#allocation1] sm:$0xff pattern:$0x75316420]
        %v295 = vld.sshfl [vmem:[#allocation1 + $0x8] sm:$0xff pattern:$0x75316420]
        %296 = vrot.lane.b32.xlu0 %v294, 15
        %v297 = vpop.permute.xlu0 %296
        %298 = vrot.lane.b32.xlu0 %v295, 15
        %v299 = vpop.permute.xlu0 %298
        %vm300 = vcmask 121856
        %v301 = vsel %vm300, %v297, %v299
        %v304 = vsel %vm300, 0.0, %v297
        %v305 = vsel %vm243, 1, 0
        %v306 = vsel %vm244, 1, 0
        %vm307 = vcmp.eq.s32.totalorder %v305, 1
        %vm308 = vcmp.eq.s32.totalorder %v306, 1
        %v309 = vsel %vm307, %v304, 0.0
        %v310 = vsel %vm308, %v301, 0.0
        %311 = vset.pattern.permute.xlu0 2
        %312 = vperm.xlu0 %311, %v232
        %v313 = vpop.permute.xlu0 %312
        %v315 = vmul.f32 %v309, %v313
        %v316 = vmul.f32 %v310, %v313
        %v317 = vadd.f32 %v291, %v315
        %v318 = vadd.f32 %v292, %v316
        %319 = vst [vmem:[#allocation1] ss:$2 sm:$0xff] %v235
        %v320 = vld.sshfl [vmem:[#allocation1] sm:$0xff pattern:$0x75316420]
        %v321 = vld.sshfl [vmem:[#allocation1 + $0x8] sm:$0xff pattern:$0x75316420]
        %322 = vrot.lane.b32.xlu0 %v320, 1
        %v323 = vpop.permute.xlu0 %322
        %324 = vrot.lane.b32.xlu0 %v321, 1
        %v325 = vpop.permute.xlu0 %324
        %vm326 = vcmask 7168
        %v327 = vsel %vm326, %v323, %v325
        %v330 = vsel %vm326, 0.0, %v323
        %v331 = vsel %vm260, %v330, 0.0
        %v332 = vsel %vm261, %v327, 0.0
        %333 = vset.pattern.permute.xlu0 3
        %334 = vperm.xlu0 %333, %v232
        %v335 = vpop.permute.xlu0 %334
        %v337 = vmul.f32 %v331, %v335
        %v338 = vmul.f32 %v332, %v335
        %v339 = vadd.f32 %v317, %v337
        %v340 = vadd.f32 %v318, %v338
        %341 = vset.pattern.permute.xlu0 4
        %342 = vperm.xlu0 %341, %v232
        %v343 = vpop.permute.xlu0 %342
        %v345 = vunpack.c.l.s4 839922192
        %v346 = vunpack.c.0.s8 %v345
        %v347 = vperm.slane %v343, %v346
        %v349 = vmul.f32 %v235, %v347
        %351 = vst [vmem:[#allocation1] ss:$2 sm:$0xff] %v349
        %v352 = vld.sshfl [vmem:[#allocation1] sm:$0xff pattern:$0x75316420]
        %v353 = vld.sshfl [vmem:[#allocation1 + $0x8] sm:$0xff pattern:$0x75316420]
        %v356 = vadd.f32 %v339, %v352
        %v357 = vadd.f32 %v340, %v353
        %358 = vst [vmem:[#allocation1] ss:$2 sm:$0xff] %v235
        %v359 = vld.sshfl [vmem:[#allocation1] sm:$0xff pattern:$0x75316420]
        %v360 = vld.sshfl [vmem:[#allocation1 + $0x8] sm:$0xff pattern:$0x75316420]
        %361 = vrot.lane.b32.xlu0 %v359, 127
        %v362 = vpop.permute.xlu0 %361
        %363 = vrot.lane.b32.xlu0 %v360, 127
        %v364 = vpop.permute.xlu0 %363
        %vm365 = vcmask 1039360
        %v366 = vsel %vm365, %v362, %v364
        %v369 = vsel %vm365, %v364, 0.0
        %v370 = vsel %vm307, %v366, 0.0
        %v371 = vsel %vm308, %v369, 0.0
        %372 = vset.pattern.permute.xlu0 5
        %373 = vperm.xlu0 %372, %v232
        %v374 = vpop.permute.xlu0 %373
        %v376 = vmul.f32 %v370, %v374
        %v377 = vmul.f32 %v371, %v374
        %v378 = vadd.f32 %v356, %v376
        %v379 = vadd.f32 %v357, %v377
        %380 = vst [vmem:[#allocation1] ss:$2 sm:$0xff] %v235
        %v381 = vld.sshfl [vmem:[#allocation1] sm:$0xff pattern:$0x75316420]
        %v382 = vld.sshfl [vmem:[#allocation1 + $0x8] sm:$0xff pattern:$0x75316420]
        %383 = vrot.lane.b32.xlu0 %v381, 113
        %v384 = vpop.permute.xlu0 %383
        %385 = vrot.lane.b32.xlu0 %v382, 113
        %v386 = vpop.permute.xlu0 %385
        %vm387 = vcmask 924672
        %v388 = vsel %vm387, %v384, %v386
        %v391 = vsel %vm387, %v386, 0.0
        %v392 = vsel %vm260, %v388, 0.0
        %v393 = vsel %vm261, %v391, 0.0
        %394 = vset.pattern.permute.xlu0 6
        %395 = vperm.xlu0 %394, %v232
        %v396 = vpop.permute.xlu0 %395
        %v398 = vmul.f32 %v392, %v396
        %v399 = vmul.f32 %v393, %v396
        %v400 = vadd.f32 %v378, %v398
        %v401 = vadd.f32 %v379, %v399
        %402 = vst [vmem:[#allocation1] ss:$2 sm:$0xff] %v235
        %v403 = vld.sshfl [vmem:[#allocation1] sm:$0xff pattern:$0x75316420]
        %v404 = vld.sshfl [vmem:[#allocation1 + $0x8] sm:$0xff pattern:$0x75316420]
        %405 = vrot.lane.b32.xlu0 %v403, 112
        %v406 = vpop.permute.xlu0 %405
        %407 = vrot.lane.b32.xlu0 %v404, 112
        %v408 = vpop.permute.xlu0 %407
        %vm409 = vcmask 916480
        %v410 = vsel %vm409, %v406, %v408
        %v413 = vsel %vm409, %v408, 0.0
        %414 = vset.pattern.permute.xlu0 7
        %415 = vperm.xlu0 %414, %v232
        %v416 = vpop.permute.xlu0 %415
        %v418 = vmul.f32 %v410, %v416
        %v419 = vmul.f32 %v413, %v416
        %v420 = vadd.f32 %v400, %v418
        %v421 = vadd.f32 %v401, %v419
        %422 = vst [vmem:[#allocation1] ss:$2 sm:$0xff] %v235
        %v423 = vld.sshfl [vmem:[#allocation1] sm:$0xff pattern:$0x75316420]
        %v424 = vld.sshfl [vmem:[#allocation1 + $0x8] sm:$0xff pattern:$0x75316420]
        %425 = vrot.lane.b32.xlu0 %v423, 111
        %v426 = vpop.permute.xlu0 %425
        %427 = vrot.lane.b32.xlu0 %v424, 111
        %v428 = vpop.permute.xlu0 %427
        %vm429 = vcmask 908288
        %v430 = vsel %vm429, %v426, %v428
        %v433 = vsel %vm429, %v428, 0.0
        %v434 = vsel %vm307, %v430, 0.0
        %v435 = vsel %vm308, %v433, 0.0
        %436 = vset.pattern.permute.xlu0 8
        %437 = vperm.xlu0 %436, %v232
        %v438 = vpop.permute.xlu0 %437
        %v440 = vmul.f32 %v434, %v438
        %v441 = vmul.f32 %v435, %v438
        %v442 = vadd.f32 %v420, %v440
        %v443 = vadd.f32 %v421, %v441
        %445 = vset.pattern.permute.xlu0 0
        %446 = vperm.xlu0 %445, %v234
        %v447 = vpop.permute.xlu0 %446
        %v449 = vadd.f32 %v447, 0.0
        %v450 = vperm.slane %v442, 0
        %v451 = vperm.slane %v443, 0
        %453 = vset.pattern.permute.xlu0 0
        %454 = vperm.xlu0 %453, %v233
        %v455 = vpop.permute.xlu0 %454
        %v457 = vmul.f32 %v450, %v455
        %v458 = vmul.f32 %v451, %v455
        %v459 = vadd.f32 %v449, %v457
        %v460 = vadd.f32 %v449, %v458
        %v461 = vperm.slane %v442, 1
        %v462 = vperm.slane %v443, 1
        %463 = vset.pattern.permute.xlu0 1
        %464 = vperm.xlu0 %463, %v233
        %v465 = vpop.permute.xlu0 %464
        %v467 = vmul.f32 %v461, %v465
        %v468 = vmul.f32 %v462, %v465
        %v469 = vadd.f32 %v459, %v467
        %v470 = vadd.f32 %v460, %v468
        %v471 = vperm.slane %v442, 2
        %v472 = vperm.slane %v443, 2
        %473 = vset.pattern.permute.xlu0 2
        %474 = vperm.xlu0 %473, %v233
        %v475 = vpop.permute.xlu0 %474
        %v477 = vmul.f32 %v471, %v475
        %v478 = vmul.f32 %v472, %v475
        %v479 = vadd.f32 %v469, %v477
        %v480 = vadd.f32 %v470, %v478
        %v481 = vperm.slane %v442, 3
        %v482 = vperm.slane %v443, 3
        %483 = vset.pattern.permute.xlu0 3
        %484 = vperm.xlu0 %483, %v233
        %v485 = vpop.permute.xlu0 %484
        %v487 = vmul.f32 %v481, %v485
        %v488 = vmul.f32 %v482, %v485
        %v489 = vadd.f32 %v479, %v487
        %v490 = vadd.f32 %v480, %v488
        %v493 = vrot.slane %v490, 6
        %vm494 = vcmask 1041408
        %v495 = vsel %vm494, %v489, %v493
        %497 = vst [vmem:[%s230] sm:$0xf] %v495
        %s498 = sand.u32 %s119, 1
        %s499 = scalar_lea.sflag [#allocation4], %s498
        %s500 = sand.u32 %s119, 1
        %s501 = smul.addr %s500, 4
        %s502 = scalar_lea.vmem [#allocation7], %s501
        // Predicated region
        $region45: #{tpu_custom_call.1} parent=35 // pred_check
          %p503 = pneg %p129
        $region46: #{tpu_custom_call.1} parent=35 // pred_check_branch
          %505 = sbr.rel (%p503) target = $region48
        $region47: #{tpu_custom_call.1} parent=35 // pred_region
          %507 = vsyncadd %s499, 0
          %s508 = smul.addr %s22, 2
          %s509 = smul.addr %s508, 2
          %s510 = scalar_lea.hbm %s4, %s509
          %s512 = sshll.u32 %s502, 4
          %s513 = int_to_ptr.vmem [resolvable:$true] %s512
          %s514 = sshll.u32 %s510, 4
          %s515 = int_to_ptr.hbm [resolvable:$true] %s514
          %517 = dma.vmem_to_hbm [thread:$0]  %s513, 64, %s515, %s499
        $region48: #{tpu_custom_call.1} parent=35 // pred_fallthru
          _
      $region36: #{tpu_custom_call.1} parent=5 // pred_fallthru
        _
      %p518 = scmp.le.s32.totalorder 2, %s17
      // Predicated region
      $region49: #{tpu_custom_call.1} parent=5 // pred_check
        %p519 = pneg %p518
      $region50: #{tpu_custom_call.1} parent=5 // pred_check_branch
        %521 = sbr.rel (%p519) target = $region52
      $region51: #{tpu_custom_call.1} parent=5 // pred_region
        %s522 = ssub.s32 %s17, 2
        // Predicated region
        $region53: #{tpu_custom_call.1} parent=51 // pred_check
          %p523 = pneg %p135
        $region54: #{tpu_custom_call.1} parent=51 // pred_check_branch
          %525 = sbr.rel (%p523) target = $region56
        $region55: #{tpu_custom_call.1} parent=51 // pred_region
          %s526 = sand.u32 %s120, 1
          %s527 = scalar_lea.sflag [#allocation4], %s526
          %s528 = sand.u32 %s120, 1
          %s529 = smul.addr %s528, 4
          %s530 = scalar_lea.vmem [#allocation7], %s529
          %532 = dma.done %s527, 64
        $region56: #{tpu_custom_call.1} parent=51 // pred_fallthru
          _
      $region52: #{tpu_custom_call.1} parent=5 // pred_fallthru
        _
    $region6: #{tpu_custom_call.1} parent=1 // loop_footer
      %s21 = sadd.s32 1, %s17
    $region7: #{tpu_custom_call.1} parent=1 // loop_footer_branch
      %16 = sbr.rel target = $region3
    $region8: #{tpu_custom_call.1} parent=1 // loop_exit
      _
    %533 = vsyncpa [#allocation3], 1
    %s534 = scalar_lea.sflag [#allocation3], 1
    %535 = vsyncpa %s534, 1
    %536 = vsyncpa [#allocation6], 1
    %537 = vsyncpa [#allocation4], 1
    %s538 = scalar_lea.sflag [#allocation4], 1
    %539 = vsyncpa %s538, 1

</llo_original>
